<compile_context>
chip_gen: v5e
topology: v5e:2x2
jax: 0.10.0
libtpu: 0.0.40
codegen_flags: <defaults>
</compile_context>

<pallas_src>
import math

import jax
import jax.numpy as jnp
from jax import lax
from jax.experimental import pallas as pl
from jax.experimental.pallas import tpu as pltpu


_X_BLOCK_BYTE_BUDGET = 8 * 1024 * 1024   # per pipeline buffer of the x stream
_MAX_BLOCK_H = 64                        # cap on the unrolled in-kernel row loop


def _make_kernel(width, w_spatial):
    """Kernel factory closing over the static conv width and spatial W."""

    def kernel(x_ref, w_ref, b_ref, out_ref, best_ref, idx_ref):
        # x_ref:    (1, Cin, TH*W)  bf16   one TH-row slab of one batch element
        # w_ref:    (Cout_blk, Cin*width) f32  (k-major / ci-minor columns)
        # b_ref:    (Cout_blk, 1)   f32
        # out_ref:  (1, Cout_blk, W) i32   argmax-over-H indices
        # best_ref: (Cout_blk, W)   f32    running max over H        [scratch]
        # idx_ref:  (Cout_blk, W)   i32    running argmax over H     [scratch]
        h_blk = pl.program_id(2)
        n_hblk = pl.num_programs(2)

        blk_l = x_ref.shape[2]              # TH * W  (lane dim of the x slab)
        block_h = blk_l // w_spatial

        @pl.when(h_blk == 0)
        def _init():
            best_ref[...] = jnp.full(best_ref.shape, -jnp.inf, jnp.float32)
            idx_ref[...] = jnp.zeros(idx_ref.shape, jnp.int32)

        # Load the slab: bf16 on the wire, f32 in registers.
        xb = x_ref[0].astype(jnp.float32)                       # (Cin, TH*W)

        # In-register im2col over the flattened (row-major) slab:
        #   xcat[k*Cin + ci, t*W + w] = x[ci, t, w + k]  for w < Wout.
        # Columns with within-row position >= Wout are garbage (row wrap) and
        # are never read by the reduction/output below.
        if width > 1:
            xe = jnp.concatenate([xb, xb[:, : width - 1]], axis=1)
            xcat = jnp.concatenate(
                [xe[:, k:k + blk_l] for k in range(width)], axis=0)
        else:
            xcat = xb                                            # (K, TH*W)

        # One wide-N MXU contraction for the whole slab, + bias + ReLU.
        acc = jnp.dot(w_ref[...], xcat, preferred_element_type=jnp.float32)
        acc = jnp.maximum(acc + b_ref[...], 0.0)                 # (Cout, TH*W)

        # Running max/argmax over H: carry across the TH in-block rows in
        # registers, touch the cross-block scratch only once per grid step.
        run_best = best_ref[...]
        run_idx = idx_ref[...]
        h_base = h_blk * block_h
        for t in range(block_h):                                 # static unroll
            row = acc[:, t * w_spatial:(t + 1) * w_spatial]      # (Cout, W)
            # strict ">" keeps the first maximal H index (torch.max semantics)
            better = row > run_best
            run_best = jnp.where(better, row, run_best)
            run_idx = jnp.where(better, h_base + t, run_idx)
        best_ref[...] = run_best
        idx_ref[...] = run_idx

        @pl.when(h_blk == n_hblk - 1)
        def _finalize():
            out_ref[0] = idx_ref[...]

    return kernel


def _pick_block_cout(c_out):
    if c_out <= 256:
        return c_out
    for cand in (256, 128, 64, 32, 16, 8):
        if c_out % cand == 0:
            return cand
    return c_out


def _pick_block_h(h, w, c_in, itemsize):
    """Largest TH with: TH | H, (TH*W) % 128 == 0 (or TH == H), fits budget."""
    row_bytes = c_in * w * itemsize

    def fits(th):
        return 2 * th * row_bytes <= _X_BLOCK_BYTE_BUDGET      # double-buffered

    if h <= _MAX_BLOCK_H and fits(h):
        return h                                  # whole H in one grid step
    unit = 128 // math.gcd(w, 128)                # smallest lane-aligned TH
    best = None
    th = unit
    while th <= min(h, _MAX_BLOCK_H):
        if h % th == 0 and fits(th):
            best = th
        th += unit
    return best if best is not None else h        # full-H fallback (always legal)


def conv1dmax_forward(x, weight, bias, *, block_h=None):
    """Eval-mode Conv1dMax forward: argmax over H of relu(conv_[1,width](x)).

    x:      (B, Cin, H, W)          float
    weight: (Cout, Cin, 1, width)   float   (PyTorch Conv2d layout)
    bias:   (Cout,)                 float
    returns (B, Cout, W - width + 1) int32  argmax-over-H indices
    """
    b, c_in, h, w = x.shape
    c_out, c_in_w, k_h, width = weight.shape
    if c_in_w != c_in or k_h != 1:
        raise ValueError("weight must have shape (Cout, Cin, 1, width)")
    w_out = w - width + 1
    if w_out < 1:
        raise ValueError(f"W={w} must be >= kernel width={width}")

    if block_h is None:
        block_h = _pick_block_h(h, w, c_in, 2)    # bf16 x stream
    else:
        if h % block_h:
            raise ValueError("block_h must divide H")
        if (block_h * w) % 128 and block_h != h:
            raise ValueError("block_h*W must be a multiple of 128 (or block_h == H)")
    block_co = _pick_block_cout(c_out)
    n_h = h // block_h
    n_co = c_out // block_co
    blk_l = block_h * w

    # Dominant stream in bf16 (free when the producer already emits bf16);
    # the trailing-dim merge moves no data in HBM.  Weights/bias stay f32
    # (tiny), so all in-kernel arithmetic is f32.
    x_flat = x.astype(jnp.bfloat16).reshape(b, c_in, h * w)
    w2 = jnp.transpose(weight[:, :, 0, :], (0, 2, 1)).reshape(
        c_out, width * c_in).astype(jnp.float32)      # col = k*Cin + ci
    b2 = bias.astype(jnp.float32).reshape(c_out, 1)

    out_full = pl.pallas_call(
        _make_kernel(width, w),
        out_shape=jax.ShapeDtypeStruct((b, c_out, w), jnp.int32),
        grid_spec=pltpu.PrefetchScalarGridSpec(
            num_scalar_prefetch=0,
            grid=(b, n_co, n_h),
            in_specs=[
                pl.BlockSpec((1, c_in, blk_l), lambda bi, ci, hi: (bi, 0, hi)),
                pl.BlockSpec((block_co, width * c_in),
                             lambda bi, ci, hi: (ci, 0)),
                pl.BlockSpec((block_co, 1), lambda bi, ci, hi: (ci, 0)),
            ],
            out_specs=pl.BlockSpec((1, block_co, w),
                                   lambda bi, ci, hi: (bi, ci, 0)),
            scratch_shapes=[
                pltpu.VMEM((block_co, w), jnp.float32),   # running max
                pltpu.VMEM((block_co, w), jnp.int32),     # running argmax
            ],
        ),
        compiler_params=pltpu.CompilerParams(
            dimension_semantics=("parallel", "parallel", "arbitrary"),
            vmem_limit_bytes=32 * 1024 * 1024),
    )(x_flat, w2, b2)

    # Columns >= Wout are not valid conv outputs; strip them outside the kernel
    # so the kernel's stores stay full-W.
    return out_full[:, :, :w_out]


if __name__ == "__main__":
    batch, in_chan, height, w_spatial = 2, 4, 16, 16
    out_chan, kwidth = 8, 3
    w_out = w_spatial - kwidth + 1

    key = jax.random.PRNGKey(0)
    kx, kw, kb = jax.random.split(key, 3)
    x = jax.random.normal(kx, (batch, in_chan, height, w_spatial), jnp.float32)
    # PyTorch Conv2d default init: U(-k, k) with k = 1/sqrt(Cin * 1 * width)
    bound = 1.0 / math.sqrt(in_chan * 1 * kwidth)
    weight = jax.random.uniform(
        kw, (out_chan, in_chan, 1, kwidth), jnp.float32, -bound, bound)
    bias = jax.random.uniform(kb, (out_chan,), jnp.float32, -bound, bound)

    fwd = jax.jit(conv1dmax_forward, static_argnames=("block_h",))
    out_auto = jax.block_until_ready(fwd(x, weight, bias))            # TH = H
    out_blk = jax.block_until_ready(fwd(x, weight, bias, block_h=8))  # 2 H-blocks

    assert out_auto.shape == (batch, out_chan, w_out), out_auto.shape
    assert out_auto.dtype == jnp.int32, out_auto.dtype
    assert bool(jnp.all((out_auto >= 0) & (out_auto < height)))
    # The multi-block path must agree exactly with the single-block path
    # (exercises the cross-block scratch carry, including tie-breaking).
    assert bool(jnp.array_equal(out_auto, out_blk)), "H-block carry mismatch"

    # Pure-JAX reference of the eval-mode forward (dropout = identity; x is
    # bf16-rounded on the wire, math in f32 — same as the kernel).
    x_bf = x.astype(jnp.bfloat16).astype(jnp.float32)
    conv = lax.conv_general_dilated(
        x_bf, weight, window_strides=(1, 1), padding="VALID",
        dimension_numbers=("NCHW", "OIHW", "NCHW"),
        precision=lax.Precision.HIGHEST)
    relu = jnp.maximum(conv + bias[None, :, None, None], 0.0)
    ref_max = jnp.max(relu, axis=2)                                   # (B, Cout, Wout)

    # Value-based check (robust to exact ties, per review guidance): the relu
    # value at the kernel's chosen H index must equal the true max over H.
    picked = jnp.take_along_axis(
        relu, out_auto[:, :, None, :], axis=2)[:, :, 0, :]
    max_err = float(jnp.max(jnp.abs(picked - ref_max)))
    assert jnp.allclose(picked, ref_max, atol=2e-2, rtol=2e-2), max_err

    print("KERNEL_OK")
</pallas_src>

<mosaic_0001>
module attributes {stable_mosaic.version = 11 : i64} {
  func.func @kernel(%arg0: i32, %arg1: i32, %arg2: i32, %arg3: memref<1x4x256xbf16, #tpu.memory_space<vmem>>, %arg4: memref<8x12xf32, #tpu.memory_space<vmem>>, %arg5: memref<8x1xf32, #tpu.memory_space<vmem>>, %arg6: memref<1x8x16xi32, #tpu.memory_space<vmem>>, %arg7: memref<8x16xf32, #tpu.memory_space<vmem>>, %arg8: memref<8x16xi32, #tpu.memory_space<vmem>>) attributes {dimension_semantics = [#tpu.dimension_semantics<parallel>, #tpu.dimension_semantics<parallel>, #tpu.dimension_semantics<arbitrary>], iteration_bounds = array<i64: 2, 1, 1>, scalar_prefetch = 0 : i64, scratch_operands = 2 : i64, tpu.core_type = #tpu.core_type<tc>, window_params = [{transform_indices = @transform_0, window_bounds = array<i64: 1, 4, 256>}, {transform_indices = @transform_1, window_bounds = array<i64: 8, 12>}, {transform_indices = @transform_2, window_bounds = array<i64: 8, 1>}, {transform_indices = @transform_3, window_bounds = array<i64: 1, 8, 16>}]} {
    %c0_i32 = arith.constant 0 : i32
    %0 = arith.cmpi eq, %arg2, %c0_i32 : i32
    %1 = arith.extui %0 : i1 to i32
    %c0_i32_0 = arith.constant 0 : i32
    %2 = arith.cmpi ne, %1, %c0_i32_0 : i32
    scf.if %2 {
      %cst_19 = arith.constant 0xFF800000 : f32
      %123 = vector.broadcast %cst_19 : f32 to vector<8x16xf32>
      %c0_20 = arith.constant 0 : index
      %c0_21 = arith.constant 0 : index
      %124 = vector.load %arg7[%c0_20, %c0_21] : memref<8x16xf32, #tpu.memory_space<vmem>>, vector<8x16xf32>
      tpu.vector_store %arg7[%c0_20, %c0_21], %123 {strides = array<i32>} : memref<8x16xf32, #tpu.memory_space<vmem>>, vector<8x16xf32>,
      %c0_i32_22 = arith.constant 0 : i32
      %125 = vector.broadcast %c0_i32_22 : i32 to vector<8x16xi32>
      %c0_23 = arith.constant 0 : index
      %c0_24 = arith.constant 0 : index
      %126 = vector.load %arg8[%c0_23, %c0_24] : memref<8x16xi32, #tpu.memory_space<vmem>>, vector<8x16xi32>
      tpu.vector_store %arg8[%c0_23, %c0_24], %125 {strides = array<i32>} : memref<8x16xi32, #tpu.memory_space<vmem>>, vector<8x16xi32>,
    } else {
    }
    %c0 = arith.constant 0 : index
    %c0_1 = arith.constant 0 : index
    %c0_2 = arith.constant 0 : index
    %3 = vector.load %arg3[%c0, %c0_1, %c0_2] : memref<1x4x256xbf16, #tpu.memory_space<vmem>>, vector<1x4x256xbf16>
    %4 = vector.shape_cast %3 : vector<1x4x256xbf16> to vector<4x256xbf16>
    %5 = arith.extf %4 : vector<4x256xbf16> to vector<4x256xf32>
    %6 = vector.extract_strided_slice %5 {offsets = [0, 0], sizes = [4, 2], strides = [1, 1]} : vector<4x256xf32> to vector<4x2xf32>
    %7 = tpu.concatenate %5, %6 in 1 : vector<4x256xf32>, vector<4x2xf32> -> vector<4x258xf32>
    %8 = vector.extract_strided_slice %7 {offsets = [0, 0], sizes = [4, 256], strides = [1, 1]} : vector<4x258xf32> to vector<4x256xf32>
    %9 = vector.extract_strided_slice %7 {offsets = [0, 1], sizes = [4, 256], strides = [1, 1]} : vector<4x258xf32> to vector<4x256xf32>
    %10 = vector.extract_strided_slice %7 {offsets = [0, 2], sizes = [4, 256], strides = [1, 1]} : vector<4x258xf32> to vector<4x256xf32>
    %11 = tpu.concatenate %8, %9, %10 in 0 : vector<4x256xf32>, vector<4x256xf32>, vector<4x256xf32> -> vector<12x256xf32>
    %c0_3 = arith.constant 0 : index
    %c0_4 = arith.constant 0 : index
    %12 = vector.load %arg4[%c0_3, %c0_4] : memref<8x12xf32, #tpu.memory_space<vmem>>, vector<8x12xf32>
    %cst = arith.constant dense<0.000000e+00> : vector<8x256xf32>
    %13 = tpu.matmul %12, %11, %cst {dimension_numbers = #tpu.dot_dimension_numbers<[1], [0], [0], [1], [0, 0, 1, 1], [], []>} : vector<8x12xf32>, vector<12x256xf32>, vector<8x256xf32> -> vector<8x256xf32>
    %c0_5 = arith.constant 0 : index
    %c0_6 = arith.constant 0 : index
    %14 = vector.load %arg5[%c0_5, %c0_6] : memref<8x1xf32, #tpu.memory_space<vmem>>, vector<8x1xf32>
    %15 = vector.broadcast %14 : vector<8x1xf32> to vector<8x256xf32>
    %16 = arith.addf %13, %15 : vector<8x256xf32>
    %cst_7 = arith.constant 0.000000e+00 : f32
    %17 = vector.broadcast %cst_7 : f32 to vector<8x256xf32>
    %18 = arith.maximumf %16, %17 : vector<8x256xf32>
    %c0_8 = arith.constant 0 : index
    %c0_9 = arith.constant 0 : index
    %19 = vector.load %arg7[%c0_8, %c0_9] : memref<8x16xf32, #tpu.memory_space<vmem>>, vector<8x16xf32>
    %c0_10 = arith.constant 0 : index
    %c0_11 = arith.constant 0 : index
    %20 = vector.load %arg8[%c0_10, %c0_11] : memref<8x16xi32, #tpu.memory_space<vmem>>, vector<8x16xi32>
    %c16_i32 = arith.constant 16 : i32
    %21 = arith.muli %arg2, %c16_i32 : i32
    %22 = vector.extract_strided_slice %18 {offsets = [0, 0], sizes = [8, 16], strides = [1, 1]} : vector<8x256xf32> to vector<8x16xf32>
    %23 = arith.cmpf ogt, %22, %19 : vector<8x16xf32>
    %24 = arith.select %23, %22, %19 : vector<8x16xi1>, vector<8x16xf32>
    %c0_i32_12 = arith.constant 0 : i32
    %25 = arith.addi %21, %c0_i32_12 : i32
    %26 = vector.broadcast %25 : i32 to vector<8x16xi32>
    %27 = arith.select %23, %26, %20 : vector<8x16xi1>, vector<8x16xi32>
    %28 = vector.extract_strided_slice %18 {offsets = [0, 16], sizes = [8, 16], strides = [1, 1]} : vector<8x256xf32> to vector<8x16xf32>
    %29 = arith.cmpf ogt, %28, %24 : vector<8x16xf32>
    %30 = arith.select %29, %28, %24 : vector<8x16xi1>, vector<8x16xf32>
    %c1_i32 = arith.constant 1 : i32
    %31 = arith.addi %21, %c1_i32 : i32
    %32 = vector.broadcast %31 : i32 to vector<8x16xi32>
    %33 = arith.select %29, %32, %27 : vector<8x16xi1>, vector<8x16xi32>
    %34 = vector.extract_strided_slice %18 {offsets = [0, 32], sizes = [8, 16], strides = [1, 1]} : vector<8x256xf32> to vector<8x16xf32>
    %35 = arith.cmpf ogt, %34, %30 : vector<8x16xf32>
    %36 = arith.select %35, %34, %30 : vector<8x16xi1>, vector<8x16xf32>
    %c2_i32 = arith.constant 2 : i32
    %37 = arith.addi %21, %c2_i32 : i32
    %38 = vector.broadcast %37 : i32 to vector<8x16xi32>
    %39 = arith.select %35, %38, %33 : vector<8x16xi1>, vector<8x16xi32>
    %40 = vector.extract_strided_slice %18 {offsets = [0, 48], sizes = [8, 16], strides = [1, 1]} : vector<8x256xf32> to vector<8x16xf32>
    %41 = arith.cmpf ogt, %40, %36 : vector<8x16xf32>
    %42 = arith.select %41, %40, %36 : vector<8x16xi1>, vector<8x16xf32>
    %c3_i32 = arith.constant 3 : i32
    %43 = arith.addi %21, %c3_i32 : i32
    %44 = vector.broadcast %43 : i32 to vector<8x16xi32>
    %45 = arith.select %41, %44, %39 : vector<8x16xi1>, vector<8x16xi32>
    %46 = vector.extract_strided_slice %18 {offsets = [0, 64], sizes = [8, 16], strides = [1, 1]} : vector<8x256xf32> to vector<8x16xf32>
    %47 = arith.cmpf ogt, %46, %42 : vector<8x16xf32>
    %48 = arith.select %47, %46, %42 : vector<8x16xi1>, vector<8x16xf32>
    %c4_i32 = arith.constant 4 : i32
    %49 = arith.addi %21, %c4_i32 : i32
    %50 = vector.broadcast %49 : i32 to vector<8x16xi32>
    %51 = arith.select %47, %50, %45 : vector<8x16xi1>, vector<8x16xi32>
    %52 = vector.extract_strided_slice %18 {offsets = [0, 80], sizes = [8, 16], strides = [1, 1]} : vector<8x256xf32> to vector<8x16xf32>
    %53 = arith.cmpf ogt, %52, %48 : vector<8x16xf32>
    %54 = arith.select %53, %52, %48 : vector<8x16xi1>, vector<8x16xf32>
    %c5_i32 = arith.constant 5 : i32
    %55 = arith.addi %21, %c5_i32 : i32
    %56 = vector.broadcast %55 : i32 to vector<8x16xi32>
    %57 = arith.select %53, %56, %51 : vector<8x16xi1>, vector<8x16xi32>
    %58 = vector.extract_strided_slice %18 {offsets = [0, 96], sizes = [8, 16], strides = [1, 1]} : vector<8x256xf32> to vector<8x16xf32>
    %59 = arith.cmpf ogt, %58, %54 : vector<8x16xf32>
    %60 = arith.select %59, %58, %54 : vector<8x16xi1>, vector<8x16xf32>
    %c6_i32 = arith.constant 6 : i32
    %61 = arith.addi %21, %c6_i32 : i32
    %62 = vector.broadcast %61 : i32 to vector<8x16xi32>
    %63 = arith.select %59, %62, %57 : vector<8x16xi1>, vector<8x16xi32>
    %64 = vector.extract_strided_slice %18 {offsets = [0, 112], sizes = [8, 16], strides = [1, 1]} : vector<8x256xf32> to vector<8x16xf32>
    %65 = arith.cmpf ogt, %64, %60 : vector<8x16xf32>
    %66 = arith.select %65, %64, %60 : vector<8x16xi1>, vector<8x16xf32>
    %c7_i32 = arith.constant 7 : i32
    %67 = arith.addi %21, %c7_i32 : i32
    %68 = vector.broadcast %67 : i32 to vector<8x16xi32>
    %69 = arith.select %65, %68, %63 : vector<8x16xi1>, vector<8x16xi32>
    %70 = vector.extract_strided_slice %18 {offsets = [0, 128], sizes = [8, 16], strides = [1, 1]} : vector<8x256xf32> to vector<8x16xf32>
    %71 = arith.cmpf ogt, %70, %66 : vector<8x16xf32>
    %72 = arith.select %71, %70, %66 : vector<8x16xi1>, vector<8x16xf32>
    %c8_i32 = arith.constant 8 : i32
    %73 = arith.addi %21, %c8_i32 : i32
    %74 = vector.broadcast %73 : i32 to vector<8x16xi32>
    %75 = arith.select %71, %74, %69 : vector<8x16xi1>, vector<8x16xi32>
    %76 = vector.extract_strided_slice %18 {offsets = [0, 144], sizes = [8, 16], strides = [1, 1]} : vector<8x256xf32> to vector<8x16xf32>
    %77 = arith.cmpf ogt, %76, %72 : vector<8x16xf32>
    %78 = arith.select %77, %76, %72 : vector<8x16xi1>, vector<8x16xf32>
    %c9_i32 = arith.constant 9 : i32
    %79 = arith.addi %21, %c9_i32 : i32
    %80 = vector.broadcast %79 : i32 to vector<8x16xi32>
    %81 = arith.select %77, %80, %75 : vector<8x16xi1>, vector<8x16xi32>
    %82 = vector.extract_strided_slice %18 {offsets = [0, 160], sizes = [8, 16], strides = [1, 1]} : vector<8x256xf32> to vector<8x16xf32>
    %83 = arith.cmpf ogt, %82, %78 : vector<8x16xf32>
    %84 = arith.select %83, %82, %78 : vector<8x16xi1>, vector<8x16xf32>
    %c10_i32 = arith.constant 10 : i32
    %85 = arith.addi %21, %c10_i32 : i32
    %86 = vector.broadcast %85 : i32 to vector<8x16xi32>
    %87 = arith.select %83, %86, %81 : vector<8x16xi1>, vector<8x16xi32>
    %88 = vector.extract_strided_slice %18 {offsets = [0, 176], sizes = [8, 16], strides = [1, 1]} : vector<8x256xf32> to vector<8x16xf32>
    %89 = arith.cmpf ogt, %88, %84 : vector<8x16xf32>
    %90 = arith.select %89, %88, %84 : vector<8x16xi1>, vector<8x16xf32>
    %c11_i32 = arith.constant 11 : i32
    %91 = arith.addi %21, %c11_i32 : i32
    %92 = vector.broadcast %91 : i32 to vector<8x16xi32>
    %93 = arith.select %89, %92, %87 : vector<8x16xi1>, vector<8x16xi32>
    %94 = vector.extract_strided_slice %18 {offsets = [0, 192], sizes = [8, 16], strides = [1, 1]} : vector<8x256xf32> to vector<8x16xf32>
    %95 = arith.cmpf ogt, %94, %90 : vector<8x16xf32>
    %96 = arith.select %95, %94, %90 : vector<8x16xi1>, vector<8x16xf32>
    %c12_i32 = arith.constant 12 : i32
    %97 = arith.addi %21, %c12_i32 : i32
    %98 = vector.broadcast %97 : i32 to vector<8x16xi32>
    %99 = arith.select %95, %98, %93 : vector<8x16xi1>, vector<8x16xi32>
    %100 = vector.extract_strided_slice %18 {offsets = [0, 208], sizes = [8, 16], strides = [1, 1]} : vector<8x256xf32> to vector<8x16xf32>
    %101 = arith.cmpf ogt, %100, %96 : vector<8x16xf32>
    %102 = arith.select %101, %100, %96 : vector<8x16xi1>, vector<8x16xf32>
    %c13_i32 = arith.constant 13 : i32
    %103 = arith.addi %21, %c13_i32 : i32
    %104 = vector.broadcast %103 : i32 to vector<8x16xi32>
    %105 = arith.select %101, %104, %99 : vector<8x16xi1>, vector<8x16xi32>
    %106 = vector.extract_strided_slice %18 {offsets = [0, 224], sizes = [8, 16], strides = [1, 1]} : vector<8x256xf32> to vector<8x16xf32>
    %107 = arith.cmpf ogt, %106, %102 : vector<8x16xf32>
    %108 = arith.select %107, %106, %102 : vector<8x16xi1>, vector<8x16xf32>
    %c14_i32 = arith.constant 14 : i32
    %109 = arith.addi %21, %c14_i32 : i32
    %110 = vector.broadcast %109 : i32 to vector<8x16xi32>
    %111 = arith.select %107, %110, %105 : vector<8x16xi1>, vector<8x16xi32>
    %112 = vector.extract_strided_slice %18 {offsets = [0, 240], sizes = [8, 16], strides = [1, 1]} : vector<8x256xf32> to vector<8x16xf32>
    %113 = arith.cmpf ogt, %112, %108 : vector<8x16xf32>
    %114 = arith.select %113, %112, %108 : vector<8x16xi1>, vector<8x16xf32>
    %c15_i32 = arith.constant 15 : i32
    %115 = arith.addi %21, %c15_i32 : i32
    %116 = vector.broadcast %115 : i32 to vector<8x16xi32>
    %117 = arith.select %113, %116, %111 : vector<8x16xi1>, vector<8x16xi32>
    %c0_13 = arith.constant 0 : index
    %c0_14 = arith.constant 0 : index
    %118 = vector.load %arg7[%c0_13, %c0_14] : memref<8x16xf32, #tpu.memory_space<vmem>>, vector<8x16xf32>
    tpu.vector_store %arg7[%c0_13, %c0_14], %114 {strides = array<i32>} : memref<8x16xf32, #tpu.memory_space<vmem>>, vector<8x16xf32>,
    %c0_15 = arith.constant 0 : index
    %c0_16 = arith.constant 0 : index
    %119 = vector.load %arg8[%c0_15, %c0_16] : memref<8x16xi32, #tpu.memory_space<vmem>>, vector<8x16xi32>
    tpu.vector_store %arg8[%c0_15, %c0_16], %117 {strides = array<i32>} : memref<8x16xi32, #tpu.memory_space<vmem>>, vector<8x16xi32>,
    %c0_i32_17 = arith.constant 0 : i32
    %120 = arith.cmpi eq, %arg2, %c0_i32_17 : i32
    %121 = arith.extui %120 : i1 to i32
    %c0_i32_18 = arith.constant 0 : i32
    %122 = arith.cmpi ne, %121, %c0_i32_18 : i32
    scf.if %122 {
      %c0_19 = arith.constant 0 : index
      %c0_20 = arith.constant 0 : index
      %123 = vector.load %arg8[%c0_19, %c0_20] : memref<8x16xi32, #tpu.memory_space<vmem>>, vector<8x16xi32>
      %c0_21 = arith.constant 0 : index
      %c0_22 = arith.constant 0 : index
      %c0_23 = arith.constant 0 : index
      %124 = vector.load %arg6[%c0_21, %c0_22, %c0_23] : memref<1x8x16xi32, #tpu.memory_space<vmem>>, vector<1x8x16xi32>
      %125 = vector.shape_cast %124 : vector<1x8x16xi32> to vector<8x16xi32>
      %126 = vector.shape_cast %123 : vector<8x16xi32> to vector<1x8x16xi32>
      tpu.vector_store %arg6[%c0_21, %c0_22, %c0_23], %126 {strides = array<i32>} : memref<1x8x16xi32, #tpu.memory_space<vmem>>, vector<1x8x16xi32>,
    } else {
    }
    return
  }
  func.func @transform_0(%arg0: i32, %arg1: i32, %arg2: i32) -> (i32, i32, i32) {
    %c0_i32 = arith.constant 0 : i32
    %c0_i32_0 = arith.constant 0 : i32
    return %arg0, %c0_i32, %arg2 : i32, i32, i32
  }
  func.func @transform_1(%arg0: i32, %arg1: i32, %arg2: i32) -> (i32, i32) {
    %c0_i32 = arith.constant 0 : i32
    %c0_i32_0 = arith.constant 0 : i32
    return %arg1, %c0_i32 : i32, i32
  }
  func.func @transform_2(%arg0: i32, %arg1: i32, %arg2: i32) -> (i32, i32) {
    %c0_i32 = arith.constant 0 : i32
    %c0_i32_0 = arith.constant 0 : i32
    return %arg1, %c0_i32 : i32, i32
  }
  func.func @transform_3(%arg0: i32, %arg1: i32, %arg2: i32) -> (i32, i32, i32) {
    %c0_i32 = arith.constant 0 : i32
    %c0_i32_0 = arith.constant 0 : i32
    return %arg0, %arg1, %c0_i32 : i32, i32, i32
  }
}

</mosaic_0001>

<llo_original>
// kernel: conv1dmax_forward.1
$region0: #{conv1dmax_forward.1}
  #allocation0 [shape = 'u32[]', space=smem, size = 0x4, offset = 0x4, fixed_abs, tag = 'smem constant byte address 0x4 - core index']
  #allocation1 [shape = 'u32[72,128]{1,0:T(1,128)}', space=vmem, size = 0x9000, scoped, tag = 'internal scratch']
  #allocation2 [shape = 'f32[8,16]{1,0:T(8,128)}', space=vmem, size = 0x1000, scoped, tag = 'scratch operand']
  #allocation3 [shape = 's32[8,16]{1,0:T(8,128)}', space=vmem, size = 0x1000, scoped, tag = 'scratch operand']
  %s0 = inlined_call_operand.vmem [shape: bf16[2,4,256], index: 0, kind: input, shape index: {}]
  %s1 = inlined_call_operand.vmem [shape: f32[8,12], index: 1, kind: input, shape index: {}]
  %s2 = inlined_call_operand.vmem [shape: f32[8,1], index: 2, kind: input, shape index: {}]
  %s3 = inlined_call_operand.hbm [shape: s32[2,8,16], index: 3, kind: output, shape index: {}]
  %s4 = sld [smem:[#allocation0]]
  $region53: #{conv1dmax_forward.1} parent=0
    _
  %s6 = ssub.s32 1, %s4
  %s7 = scalar_select 0, %s6, %s4
  $region1: #{conv1dmax_forward.1} parent=0
    #allocation4 [shape = 'u8[8192]{0}', space=vmem, size = 0x2000, scoped, tag = 'output window, operand 0']
    #allocation5 [shape = 's32[2]{0}', space=sflag, size = 0x8, scoped, tag = 'scoped memory for conv1dmax_forward.1']
    %8 = vsyncpa [#allocation5], 0
    %s9 = scalar_lea.sflag [#allocation5], 1
    %10 = vsyncpa %s9, 0
    loop: start=0, step=1, limit=4
    $region2: #{conv1dmax_forward.1} parent=1 // loop_pre_header
      _
    $region3: #{conv1dmax_forward.1} parent=1 // loop_header
      %s12 = sphi 0, %s16
      %p13 = scmp.ge.s32.totalorder %s12, 4
      %s19 = sphi 0, %s38
      %s20 = sphi 0, %s34
      %s21 = sphi 0, %s30
      %s22 = sphi 0, %s19
      %s23 = sphi 0, %s20
      %s24 = sphi 0, %s21
      %s25 = sphi 0, %s22
      %s26 = sphi 0, %s23
      %s27 = sphi 0, %s24
      %s43 = sphi 0, %s45
      %s46 = sphi 0, %s43
      %s47 = sphi 0, %s46
      %s63 = sphi 0, %s47
      %s69 = sphi 0, %s71
      %s72 = sphi 0, %s69
      %s73 = sphi 0, %s72
      %s89 = sphi 0, %s73
      %s95 = sphi 0, %s97
      %s98 = sphi 0, %s95
      %s99 = sphi 0, %s98
      %s115 = sphi 0, %s99
      %s123 = sphi 0, %s125
      %s126 = sphi 0, %s123
      %s127 = sphi 0, %s126
      %s143 = sphi 0, %s127
    $region4: #{conv1dmax_forward.1} parent=1 // loop_header_branch
      %15 = sbr.rel (%p13) target = $region8
    $region5: #{conv1dmax_forward.1} parent=1 // loop_body
      %s17 = ssub.s32 %s12, 1
      %s18 = ssub.s32 %s12, 2
      %s28 = sadd.s32 1, %s21
      %p29 = scmp.ge.s32.totalorder %s28, 1
      %s30 = scalar_select %p29, 0, %s28
      %s31 = sadd.s32 1, %s20
      %s32 = scalar_select %p29, %s31, %s20
      %p33 = scmp.ge.s32.totalorder %s32, 1
      %s34 = scalar_select %p33, 0, %s32
      %s35 = sadd.s32 1, %s19
      %s36 = scalar_select %p33, %s35, %s19
      %p37 = scmp.ge.s32.totalorder %s36, 2
      %s38 = scalar_select %p37, 0, %s36
      %s39 = ssub.s32 %s19, %s38
      %s40 = ssub.s32 %s21, %s30
      %s41 = sor.u32 %s39, %s40
      %p42 = scmp.eq.s32.totalorder %s41, 0
      %s44 = sadd.s32 %s43, 1
      %s45 = scalar_select %p42, %s43, %s44
      %p48 = pneg %p42
      %p49 = scmp.eq.s32.totalorder %s12, 1
      %p50 = por %p48, %p49
      %p51 = scmp.ne.s32.totalorder %s43, %s46
      %p52 = scmp.eq.s32.totalorder %s12, 0
      %p53 = por %p51, %p52
      %p54 = scmp.ne.s32.totalorder %s43, %s46
      %p55 = scmp.eq.s32.totalorder %s17, 1
      %p56 = por %p54, %p55
      %p57 = scmp.ne.s32.totalorder %s46, %s47
      %p58 = scmp.eq.s32.totalorder %s17, 0
      %p59 = por %p57, %p58
      %p60 = scmp.ne.s32.totalorder %s46, %s47
      %p61 = scmp.eq.s32.totalorder %s18, 1
      %p62 = por %p60, %p61
      %p64 = scmp.ne.s32.totalorder %s47, %s63
      %p65 = scmp.eq.s32.totalorder %s18, 0
      %p66 = por %p64, %p65
      %s67 = ssub.s32 %s20, %s34
      %p68 = scmp.eq.s32.totalorder %s67, 0
      %s70 = sadd.s32 %s69, 1
      %s71 = scalar_select %p68, %s69, %s70
      %p74 = pneg %p68
      %p75 = scmp.eq.s32.totalorder %s12, 1
      %p76 = por %p74, %p75
      %p77 = scmp.ne.s32.totalorder %s69, %s72
      %p78 = scmp.eq.s32.totalorder %s12, 0
      %p79 = por %p77, %p78
      %p80 = scmp.ne.s32.totalorder %s69, %s72
      %p81 = scmp.eq.s32.totalorder %s17, 1
      %p82 = por %p80, %p81
      %p83 = scmp.ne.s32.totalorder %s72, %s73
      %p84 = scmp.eq.s32.totalorder %s17, 0
      %p85 = por %p83, %p84
      %p86 = scmp.ne.s32.totalorder %s72, %s73
      %p87 = scmp.eq.s32.totalorder %s18, 1
      %p88 = por %p86, %p87
      %p90 = scmp.ne.s32.totalorder %s73, %s89
      %p91 = scmp.eq.s32.totalorder %s18, 0
      %p92 = por %p90, %p91
      %s93 = ssub.s32 %s20, %s34
      %p94 = scmp.eq.s32.totalorder %s93, 0
      %s96 = sadd.s32 %s95, 1
      %s97 = scalar_select %p94, %s95, %s96
      %p100 = pneg %p94
      %p101 = scmp.eq.s32.totalorder %s12, 1
      %p102 = por %p100, %p101
      %p103 = scmp.ne.s32.totalorder %s95, %s98
      %p104 = scmp.eq.s32.totalorder %s12, 0
      %p105 = por %p103, %p104
      %p106 = scmp.ne.s32.totalorder %s95, %s98
      %p107 = scmp.eq.s32.totalorder %s17, 1
      %p108 = por %p106, %p107
      %p109 = scmp.ne.s32.totalorder %s98, %s99
      %p110 = scmp.eq.s32.totalorder %s17, 0
      %p111 = por %p109, %p110
      %p112 = scmp.ne.s32.totalorder %s98, %s99
      %p113 = scmp.eq.s32.totalorder %s18, 1
      %p114 = por %p112, %p113
      %p116 = scmp.ne.s32.totalorder %s99, %s115
      %p117 = scmp.eq.s32.totalorder %s18, 0
      %p118 = por %p116, %p117
      %s119 = ssub.s32 %s19, %s38
      %s120 = ssub.s32 %s20, %s34
      %s121 = sor.u32 %s119, %s120
      %p122 = scmp.eq.s32.totalorder %s121, 0
      %s124 = sadd.s32 %s123, 1
      %s125 = scalar_select %p122, %s123, %s124
      %p128 = pneg %p122
      %p129 = scmp.eq.s32.totalorder %s12, 1
      %p130 = por %p128, %p129
      %p131 = scmp.ne.s32.totalorder %s123, %s126
      %p132 = scmp.eq.s32.totalorder %s12, 0
      %p133 = por %p131, %p132
      %p134 = scmp.ne.s32.totalorder %s123, %s126
      %p135 = scmp.eq.s32.totalorder %s17, 1
      %p136 = por %p134, %p135
      %p137 = scmp.ne.s32.totalorder %s126, %s127
      %p138 = scmp.eq.s32.totalorder %s17, 0
      %p139 = por %p137, %p138
      %p140 = scmp.ne.s32.totalorder %s126, %s127
      %p141 = scmp.eq.s32.totalorder %s18, 1
      %p142 = por %p140, %p141
      %p144 = scmp.ne.s32.totalorder %s127, %s143
      %p145 = scmp.eq.s32.totalorder %s18, 0
      %p146 = por %p144, %p145
      %p147 = scmp.le.s32.totalorder 1, %s12
      %p148 = scmp.lt.s32.totalorder %s12, 3
      %p149 = pnand %p147, %p148
      %p150 = pneg %p149
      // Predicated region
      $region9: #{conv1dmax_forward.1} parent=5 // pred_check
        _
      $region10: #{conv1dmax_forward.1} parent=5 // pred_check_branch
        %152 = sbr.rel (%p149) target = $region12
      $region11: #{conv1dmax_forward.1} parent=5 // pred_region
        %s153 = ssub.s32 %s12, 1
        // Predicated region
        $region13: #{conv1dmax_forward.1} parent=11 // pred_check
          %p154 = pneg %p85
        $region14: #{conv1dmax_forward.1} parent=11 // pred_check_branch
          %156 = sbr.rel (%p154) target = $region16
        $region15: #{conv1dmax_forward.1} parent=11 // pred_region
          %p157 = scmp.lt.s32.totalorder %s23, 0
          %s158 = scalar_select %p157, %s23, 0
          %s159 = smul.addr %s158, 8
          %s160 = scalar_lea.vmem %s1, %s159
        $region16: #{conv1dmax_forward.1} parent=11 // pred_fallthru
          _
        // Predicated region
        $region17: #{conv1dmax_forward.1} parent=11 // pred_check
          %p161 = pneg %p111
        $region18: #{conv1dmax_forward.1} parent=11 // pred_check_branch
          %163 = sbr.rel (%p161) target = $region20
        $region19: #{conv1dmax_forward.1} parent=11 // pred_region
          %p164 = scmp.lt.s32.totalorder %s23, 0
          %s165 = scalar_select %p164, %s23, 0
          %s166 = smul.addr %s165, 8
          %s167 = scalar_lea.vmem %s2, %s166
        $region20: #{conv1dmax_forward.1} parent=11 // pred_fallthru
          _
      $region12: #{conv1dmax_forward.1} parent=5 // pred_fallthru
        _
      %p168 = scmp.lt.s32.totalorder %s12, 2
      // Predicated region
      $region21: #{conv1dmax_forward.1} parent=5 // pred_check
        %p169 = pneg %p168
      $region22: #{conv1dmax_forward.1} parent=5 // pred_check_branch
        %171 = sbr.rel (%p169) target = $region24
      $region23: #{conv1dmax_forward.1} parent=5 // pred_region
        // Predicated region
        $region25: #{conv1dmax_forward.1} parent=23 // pred_check
          %p172 = pneg %p53
        $region26: #{conv1dmax_forward.1} parent=23 // pred_check_branch
          %174 = sbr.rel (%p172) target = $region28
        $region27: #{conv1dmax_forward.1} parent=23 // pred_region
          %s175 = smul.u32 2, %s21
          %p176 = scmp.lt.s32.totalorder %s19, 1
          %s177 = scalar_select %p176, %s19, 1
          %p178 = scmp.lt.s32.totalorder %s175, 1
          %s179 = scalar_select %p178, %s175, 1
          %s180 = smul.addr %s177, 2
          %s181 = sadd.s32 %s179, %s180
          %s182 = smul.addr %s181, 2
          %s183 = scalar_lea.vmem %s0, %s182
          %s184 = smul.u32 2, %s21
        $region28: #{conv1dmax_forward.1} parent=23 // pred_fallthru
          _
      $region24: #{conv1dmax_forward.1} parent=5 // pred_fallthru
        _
      %p185 = scmp.le.s32.totalorder 1, %s12
      %p186 = scmp.lt.s32.totalorder %s12, 3
      %p187 = pnand %p185, %p186
      %p188 = pneg %p187
      // Predicated region
      $region29: #{conv1dmax_forward.1} parent=5 // pred_check
        _
      $region30: #{conv1dmax_forward.1} parent=5 // pred_check_branch
        %190 = sbr.rel (%p187) target = $region32
      $region31: #{conv1dmax_forward.1} parent=5 // pred_region
        %s191 = ssub.s32 %s12, 1
        %s192 = smul.u32 2, %s24
        %p193 = scmp.lt.s32.totalorder %s22, 1
        %s194 = scalar_select %p193, %s22, 1
        %p195 = scmp.lt.s32.totalorder %s192, 1
        %s196 = scalar_select %p195, %s192, 1
        %s197 = smul.addr %s194, 2
        %s198 = sadd.s32 %s196, %s197
        %s199 = smul.addr %s198, 2
        %s200 = scalar_lea.vmem %s0, %s199
        %p201 = pneg %p59
        %p202 = pneg %p56
        %p203 = scmp.lt.s32.totalorder %s23, 0
        %s204 = scalar_select %p203, %s23, 0
        %s205 = smul.addr %s204, 8
        %s206 = scalar_lea.vmem %s1, %s205
        %p207 = pneg %p85
        %p208 = pneg %p82
        %p209 = scmp.lt.s32.totalorder %s23, 0
        %s210 = scalar_select %p209, %s23, 0
        %s211 = smul.addr %s210, 8
        %s212 = scalar_lea.vmem %s2, %s211
        %p213 = pneg %p111
        %p214 = pneg %p108
        %p215 = pneg %p139
        %p216 = pneg %p136
        %s217 = sand.u32 %s126, 1
        %s218 = scalar_lea.sflag [#allocation5], %s217
        %s219 = sand.u32 %s126, 1
        %s220 = smul.addr %s219, 8
        %s221 = scalar_lea.vmem [#allocation4], %s220
        %s222 = smul.u32 2, %s24
        %p223 = scmp.lt.s32.totalorder %s22, 1
        %s224 = scalar_select %p223, %s22, 1
        %p225 = scmp.lt.s32.totalorder %s222, 1
        %s226 = scalar_select %p225, %s222, 1
        %s227 = smul.addr %s224, 2
        %s228 = sadd.s32 %s226, %s227
        %s229 = smul.addr %s228, 2
        %s230 = scalar_lea.vmem %s0, %s229
        %s231 = smul.u32 2, %s24
        %p232 = scmp.lt.s32.totalorder %s23, 0
        %s233 = scalar_select %p232, %s23, 0
        %s234 = smul.addr %s233, 8
        %s235 = scalar_lea.vmem %s1, %s234
        %p236 = scmp.lt.s32.totalorder %s23, 0
        %s237 = scalar_select %p236, %s23, 0
        %s238 = smul.addr %s237, 8
        %s239 = scalar_lea.vmem %s2, %s238
        %p240 = scmp.eq.s32.totalorder %s24, 0
        // Predicated region
        $region33: #{conv1dmax_forward.1} parent=31 // pred_check
          %p241 = pneg %p240
        $region34: #{conv1dmax_forward.1} parent=31 // pred_check_branch
          %243 = sbr.rel (%p241) target = $region36
        $region35: #{conv1dmax_forward.1} parent=31 // pred_region
          %vm244 = vcmask 130048
          %245 = vst.msk [vmem:[#allocation2] sm:$0xff] %vm244, -inf
          %246 = vst.msk [vmem:[#allocation3] sm:$0xff] %vm244, 0
        $region36: #{conv1dmax_forward.1} parent=31 // pred_fallthru
          _
        %v247 = vld [vmem:[%s230] sm:$0xf]
        %v248 = vunpack.c.l.bf16 %v247
        %250 = vst [vmem:[#allocation1] ss:$2 sm:$0xff] %v248
        %v251 = vld.sshfl [vmem:[#allocation1] sm:$0xff pattern:$0x75316420]
        %v252 = vld.sshfl [vmem:[#allocation1 + $0x8] sm:$0xff pattern:$0x75316420]
        %v255 = vrot.slane %v251, 4
        %v256 = vrot.slane %v252, 4
        %v257 = vrot.slane %v248, 4
        %258 = vrot.lane.b32.xlu0 %v255, 127
        %v259 = vpop.permute.xlu0 %258
        %260 = vrot.lane.b32.xlu0 %v256, 127
        %v261 = vpop.permute.xlu0 %260
        %262 = vrot.lane.b32.xlu0 %v257, 127
        %v263 = vpop.permute.xlu0 %262
        %vm264 = vcmask 1039360
        %v265 = vsel %vm264, %v259, %v261
        %v266 = vsel %vm264, %v261, %v263
        %269 = vrot.lane.b32.xlu0 %v251, 126
        %v270 = vpop.permute.xlu0 %269
        %271 = vrot.lane.b32.xlu0 %v252, 126
        %v272 = vpop.permute.xlu0 %271
        %273 = vrot.lane.b32.xlu0 %v248, 126
        %v274 = vpop.permute.xlu0 %273
        %vm275 = vcmask 1031168
        %v276 = vsel %vm275, %v270, %v272
        %v277 = vsel %vm275, %v272, %v274
        %vm278 = vcmask 1043456
        %v279 = vsel %vm278, %v251, %v265
        %v280 = vsel %vm278, %v252, %v266
        %v281 = vld [vmem:[%s235] sm:$0xff]
        %v282 = vld [vmem:[%s239] sm:$0xff]
        %284 = vset.pattern.permute.xlu0 0
        %285 = vperm.xlu0 %284, %v282
        %v286 = vpop.permute.xlu0 %285
        %vm288 = vcmask 97280
        %v290 = vsel %vm288, %v281, 0
        %v292 = vsel %vm278, %v276, 0
        %v294 = vsel %vm278, %v277, 0
        %296 = vmatpush.msra.mxu0 0.0
        %297 = vmatpush.msra.mxu0 0.0
        %298 = vmatpush.msra.mxu0 0.0
        %299 = vmatpush.msra.mxu0 0.0
        %300 = vmatpush.msra.mxu0 0.0
        %301 = vmatpush.msra.mxu0 0.0
        %302 = vmatpush.msra.mxu0 0.0
        %303 = vmatpush.msra.mxu0 0.0
        %304 = vmatpush.msra.mxu0 0.0
        %305 = vmatpush.msra.mxu0 0.0
        %306 = vmatpush.msra.mxu0 0.0
        %307 = vmatpush.msra.mxu0 0.0
        %308 = vmatpush.msra.mxu0 0.0
        %309 = vmatpush.msra.mxu0 0.0
        %310 = vmatpush.msra.mxu0 %v292
        %311 = vmatpush.msra.mxu0 %v279
        %312 = vmatmul.f32.gmra.mxu0 %v290
        %v313 = vpop.f32.mrf.mxu0
        %v314 = vadd.f32 %v286, %v313
        %315 = vdwg.mxu0
        %316 = vmatpush.msra.mxu0 0.0
        %317 = vmatpush.msra.mxu0 0.0
        %318 = vmatpush.msra.mxu0 0.0
        %319 = vmatpush.msra.mxu0 0.0
        %320 = vmatpush.msra.mxu0 0.0
        %321 = vmatpush.msra.mxu0 0.0
        %322 = vmatpush.msra.mxu0 0.0
        %323 = vmatpush.msra.mxu0 0.0
        %324 = vmatpush.msra.mxu0 0.0
        %325 = vmatpush.msra.mxu0 0.0
        %326 = vmatpush.msra.mxu0 0.0
        %327 = vmatpush.msra.mxu0 0.0
        %328 = vmatpush.msra.mxu0 0.0
        %329 = vmatpush.msra.mxu0 0.0
        %330 = vmatpush.msra.mxu0 %v294
        %331 = vmatpush.msra.mxu0 %v280
        %332 = vmatmul.f32.gmra.mxu0 %v290
        %v333 = vpop.f32.mrf.mxu0
        %v334 = vadd.f32 %v286, %v333
        %335 = vdwg.mxu0
        %v336 = vmax.f32 %v314, 0.0
        %v337 = vmax.f32 %v334, 0.0
        %v338 = vld [vmem:[#allocation2] sm:$0xff]
        %v339 = vld [vmem:[#allocation3] sm:$0xff]
        %s340 = smul.u32 %s24, 16
        %vm341 = vcmp.gt.f32.partialorder %v336, %v338
        %v342 = vsel %vm341, %v336, %v338
        %v343 = vstv %s340
        %v344 = vsel %vm341, %v343, %v339
        %346 = vrot.lane.b32.xlu0 %v342, 16
        %v347 = vpop.permute.xlu0 %346
        %vm349 = vcmp.gt.f32.partialorder %v336, %v347
        %v350 = vsel %vm349, %v336, %v347
        %s351 = sadd.s32 %s340, 1
        %v352 = vstv %s351
        %353 = vrot.lane.b32.xlu0 %v344, 16
        %v354 = vpop.permute.xlu0 %353
        %v355 = vsel %vm349, %v352, %v354
        %357 = vrot.lane.b32.xlu0 %v350, 16
        %v358 = vpop.permute.xlu0 %357
        %vm360 = vcmp.gt.f32.partialorder %v336, %v358
        %v361 = vsel %vm360, %v336, %v358
        %s362 = sadd.s32 %s340, 2
        %v363 = vstv %s362
        %364 = vrot.lane.b32.xlu0 %v355, 16
        %v365 = vpop.permute.xlu0 %364
        %v366 = vsel %vm360, %v363, %v365
        %368 = vrot.lane.b32.xlu0 %v361, 16
        %v369 = vpop.permute.xlu0 %368
        %vm371 = vcmp.gt.f32.partialorder %v336, %v369
        %v372 = vsel %vm371, %v336, %v369
        %s373 = sadd.s32 %s340, 3
        %v374 = vstv %s373
        %375 = vrot.lane.b32.xlu0 %v366, 16
        %v376 = vpop.permute.xlu0 %375
        %v377 = vsel %vm371, %v374, %v376
        %379 = vrot.lane.b32.xlu0 %v372, 16
        %v380 = vpop.permute.xlu0 %379
        %vm382 = vcmp.gt.f32.partialorder %v336, %v380
        %v383 = vsel %vm382, %v336, %v380
        %s384 = sadd.s32 %s340, 4
        %v385 = vstv %s384
        %386 = vrot.lane.b32.xlu0 %v377, 16
        %v387 = vpop.permute.xlu0 %386
        %v388 = vsel %vm382, %v385, %v387
        %390 = vrot.lane.b32.xlu0 %v383, 16
        %v391 = vpop.permute.xlu0 %390
        %vm393 = vcmp.gt.f32.partialorder %v336, %v391
        %v394 = vsel %vm393, %v336, %v391
        %s395 = sadd.s32 %s340, 5
        %v396 = vstv %s395
        %397 = vrot.lane.b32.xlu0 %v388, 16
        %v398 = vpop.permute.xlu0 %397
        %v399 = vsel %vm393, %v396, %v398
        %401 = vrot.lane.b32.xlu0 %v394, 16
        %v402 = vpop.permute.xlu0 %401
        %vm404 = vcmp.gt.f32.partialorder %v336, %v402
        %v405 = vsel %vm404, %v336, %v402
        %s406 = sadd.s32 %s340, 6
        %v407 = vstv %s406
        %408 = vrot.lane.b32.xlu0 %v399, 16
        %v409 = vpop.permute.xlu0 %408
        %v410 = vsel %vm404, %v407, %v409
        %412 = vrot.lane.b32.xlu0 %v405, 16
        %v413 = vpop.permute.xlu0 %412
        %vm415 = vcmp.gt.f32.partialorder %v336, %v413
        %v416 = vsel %vm415, %v336, %v413
        %s417 = sadd.s32 %s340, 7
        %v418 = vstv %s417
        %419 = vrot.lane.b32.xlu0 %v410, 16
        %v420 = vpop.permute.xlu0 %419
        %v421 = vsel %vm415, %v418, %v420
        %423 = vrot.lane.b32.xlu0 %v416, 16
        %v424 = vpop.permute.xlu0 %423
        %vm426 = vcmp.gt.f32.partialorder %v337, %v424
        %v427 = vsel %vm426, %v337, %v424
        %s428 = sadd.s32 %s340, 8
        %v429 = vstv %s428
        %430 = vrot.lane.b32.xlu0 %v421, 16
        %v431 = vpop.permute.xlu0 %430
        %v432 = vsel %vm426, %v429, %v431
        %434 = vrot.lane.b32.xlu0 %v427, 16
        %v435 = vpop.permute.xlu0 %434
        %vm437 = vcmp.gt.f32.partialorder %v337, %v435
        %v438 = vsel %vm437, %v337, %v435
        %s439 = sadd.s32 %s340, 9
        %v440 = vstv %s439
        %441 = vrot.lane.b32.xlu0 %v432, 16
        %v442 = vpop.permute.xlu0 %441
        %v443 = vsel %vm437, %v440, %v442
        %445 = vrot.lane.b32.xlu0 %v438, 16
        %v446 = vpop.permute.xlu0 %445
        %vm448 = vcmp.gt.f32.partialorder %v337, %v446
        %v449 = vsel %vm448, %v337, %v446
        %s450 = sadd.s32 %s340, 10
        %v451 = vstv %s450
        %452 = vrot.lane.b32.xlu0 %v443, 16
        %v453 = vpop.permute.xlu0 %452
        %v454 = vsel %vm448, %v451, %v453
        %456 = vrot.lane.b32.xlu0 %v449, 16
        %v457 = vpop.permute.xlu0 %456
        %vm459 = vcmp.gt.f32.partialorder %v337, %v457
        %v460 = vsel %vm459, %v337, %v457
        %s461 = sadd.s32 %s340, 11
        %v462 = vstv %s461
        %463 = vrot.lane.b32.xlu0 %v454, 16
        %v464 = vpop.permute.xlu0 %463
        %v465 = vsel %vm459, %v462, %v464
        %467 = vrot.lane.b32.xlu0 %v460, 16
        %v468 = vpop.permute.xlu0 %467
        %vm470 = vcmp.gt.f32.partialorder %v337, %v468
        %v471 = vsel %vm470, %v337, %v468
        %s472 = sadd.s32 %s340, 12
        %v473 = vstv %s472
        %474 = vrot.lane.b32.xlu0 %v465, 16
        %v475 = vpop.permute.xlu0 %474
        %v476 = vsel %vm470, %v473, %v475
        %478 = vrot.lane.b32.xlu0 %v471, 16
        %v479 = vpop.permute.xlu0 %478
        %vm481 = vcmp.gt.f32.partialorder %v337, %v479
        %v482 = vsel %vm481, %v337, %v479
        %s483 = sadd.s32 %s340, 13
        %v484 = vstv %s483
        %485 = vrot.lane.b32.xlu0 %v476, 16
        %v486 = vpop.permute.xlu0 %485
        %v487 = vsel %vm481, %v484, %v486
        %489 = vrot.lane.b32.xlu0 %v482, 16
        %v490 = vpop.permute.xlu0 %489
        %vm492 = vcmp.gt.f32.partialorder %v337, %v490
        %v493 = vsel %vm492, %v337, %v490
        %s494 = sadd.s32 %s340, 14
        %v495 = vstv %s494
        %496 = vrot.lane.b32.xlu0 %v487, 16
        %v497 = vpop.permute.xlu0 %496
        %v498 = vsel %vm492, %v495, %v497
        %500 = vrot.lane.b32.xlu0 %v493, 16
        %v501 = vpop.permute.xlu0 %500
        %vm503 = vcmp.gt.f32.partialorder %v337, %v501
        %v504 = vsel %vm503, %v337, %v501
        %s505 = sadd.s32 %s340, 15
        %v506 = vstv %s505
        %507 = vrot.lane.b32.xlu0 %v498, 16
        %v508 = vpop.permute.xlu0 %507
        %v509 = vsel %vm503, %v506, %v508
        %511 = vrot.lane.b32.xlu0 %v504, 16
        %v512 = vpop.permute.xlu0 %511
        %vm514 = vcmask 130048
        %515 = vst.msk [vmem:[#allocation2] sm:$0xff] %vm514, %v512
        %516 = vrot.lane.b32.xlu0 %v509, 16
        %v517 = vpop.permute.xlu0 %516
        %518 = vst.msk [vmem:[#allocation3] sm:$0xff] %vm514, %v517
        // Predicated region
        $region37: #{conv1dmax_forward.1} parent=31 // pred_check
          %p519 = pneg %p240
        $region38: #{conv1dmax_forward.1} parent=31 // pred_check_branch
          %521 = sbr.rel (%p519) target = $region40
        $region39: #{conv1dmax_forward.1} parent=31 // pred_region
          %v522 = vld [vmem:[#allocation3] sm:$0xff]
          %523 = vst.msk [vmem:[%s221] sm:$0xff] %vm514, %v522
        $region40: #{conv1dmax_forward.1} parent=31 // pred_fallthru
          _
        %s524 = sand.u32 %s126, 1
        %s525 = scalar_lea.sflag [#allocation5], %s524
        %s526 = sand.u32 %s126, 1
        %s527 = smul.addr %s526, 8
        %s528 = scalar_lea.vmem [#allocation4], %s527
        // Predicated region
        $region41: #{conv1dmax_forward.1} parent=31 // pred_check
          %p529 = pneg %p136
        $region42: #{conv1dmax_forward.1} parent=31 // pred_check_branch
          %531 = sbr.rel (%p529) target = $region44
        $region43: #{conv1dmax_forward.1} parent=31 // pred_region
          %533 = vsyncadd %s525, 0
          %s534 = sadd.s32 %s23, %s22
          %s535 = smul.addr %s534, 8
          %s536 = scalar_lea.hbm %s3, %s535
          %s538 = sshll.u32 %s528, 4
          %s539 = int_to_ptr.vmem [resolvable:$true] %s538
          %s540 = sshll.u32 %s536, 4
          %s541 = int_to_ptr.hbm [resolvable:$true] %s540
          %543 = dma.vmem_to_hbm [thread:$0]  %s539, 128, %s541, %s525
        $region44: #{conv1dmax_forward.1} parent=31 // pred_fallthru
          _
      $region32: #{conv1dmax_forward.1} parent=5 // pred_fallthru
        _
      %p544 = scmp.le.s32.totalorder 2, %s12
      // Predicated region
      $region45: #{conv1dmax_forward.1} parent=5 // pred_check
        %p545 = pneg %p544
      $region46: #{conv1dmax_forward.1} parent=5 // pred_check_branch
        %547 = sbr.rel (%p545) target = $region48
      $region47: #{conv1dmax_forward.1} parent=5 // pred_region
        %s548 = ssub.s32 %s12, 2
        // Predicated region
        $region49: #{conv1dmax_forward.1} parent=47 // pred_check
          %p549 = pneg %p142
        $region50: #{conv1dmax_forward.1} parent=47 // pred_check_branch
          %551 = sbr.rel (%p549) target = $region52
        $region51: #{conv1dmax_forward.1} parent=47 // pred_region
          %s552 = sand.u32 %s127, 1
          %s553 = scalar_lea.sflag [#allocation5], %s552
          %s554 = sand.u32 %s127, 1
          %s555 = smul.addr %s554, 8
          %s556 = scalar_lea.vmem [#allocation4], %s555
          %558 = dma.done %s553, 128
        $region52: #{conv1dmax_forward.1} parent=47 // pred_fallthru
          _
      $region48: #{conv1dmax_forward.1} parent=5 // pred_fallthru
        _
    $region6: #{conv1dmax_forward.1} parent=1 // loop_footer
      %s16 = sadd.s32 1, %s12
    $region7: #{conv1dmax_forward.1} parent=1 // loop_footer_branch
      %11 = sbr.rel target = $region3
    $region8: #{conv1dmax_forward.1} parent=1 // loop_exit
      _
    %559 = vsyncpa [#allocation5], 1
    %s560 = scalar_lea.sflag [#allocation5], 1
    %561 = vsyncpa %s560, 1

</llo_original>
